<compile_context>
chip_gen: v7x
topology: tpu7x:2x2x1
jax: 0.10.0
libtpu: 0.0.40
codegen_flags: <defaults>
</compile_context>

<pallas_src>
import functools

import jax
import jax.numpy as jnp
from jax.experimental import pallas as pl
from jax.experimental.pallas import tpu as pltpu


def _round_up(x, m):
    return (x + m - 1) // m * m


def _sigmoid_via_tanh(x):
    # sigmoid(x) == 0.5 * (tanh(0.5 * x) + 1): one EUP transcendental, no VPU divide.
    return 0.5 * jnp.tanh(0.5 * x) + 0.5


# ---------------------------------------------------------------------------
# Kernel: 4 bf16 MXU matmuls with f32 accumulation.
#   encode[0] -> sigmoid -> (Lchain@w2)^T -> w3^T + bmid -> sigmoid -> decode[2]
# ---------------------------------------------------------------------------
def autoencoder_kernel(y_ref,
                       w1t_ref, b1_ref,      # encode[0]:       (N_PAD, H_PAD), (1, H_PAD)
                       at_ref,               # (Lchain @ w2)^T: (H_PAD, T_PAD)
                       w3t_ref, bmid_ref,    # decode[0] fold:  (T_PAD, H_PAD), (1, H_PAD)
                       w4t_ref, b4_ref,      # decode[2]:       (H_PAD, N_PAD), (1, N_PAD)
                       out_ref):
    f32 = jnp.float32
    bf16 = jnp.bfloat16

    y = y_ref[...].astype(bf16)
    p1 = jnp.dot(y, w1t_ref[...], preferred_element_type=f32) + b1_ref[...]
    h1 = _sigmoid_via_tanh(p1)

    z = jnp.dot(h1.astype(bf16), at_ref[...], preferred_element_type=f32)
    p2 = jnp.dot(z.astype(bf16), w3t_ref[...], preferred_element_type=f32) + bmid_ref[...]
    h2 = _sigmoid_via_tanh(p2)

    out = jnp.dot(h2.astype(bf16), w4t_ref[...], preferred_element_type=f32) + b4_ref[...]
    out_ref[...] = out.astype(out_ref.dtype)


# ---------------------------------------------------------------------------
# Parameter init (PyTorch-style) and one-time packing/folding/padding.
# ---------------------------------------------------------------------------
def init_params(key, N, trunc, hidden=500):
    """Deterministic PyTorch-style Linear init: U(-1/sqrt(fan_in), 1/sqrt(fan_in))."""
    def linear(k, fan_in, fan_out, bias=True):
        kw, kb = jax.random.split(k)
        bound = 1.0 / jnp.sqrt(jnp.float32(fan_in))
        w = jax.random.uniform(kw, (fan_out, fan_in), jnp.float32, -bound, bound)
        b = (jax.random.uniform(kb, (fan_out,), jnp.float32, -bound, bound)
             if bias else None)
        return w, b

    keys = jax.random.split(key, 9)
    params = {}
    params["w1"], params["b1"] = linear(keys[0], N, hidden)          # encode[0]
    params["w2"], params["b2"] = linear(keys[1], hidden, trunc)      # encode[2]
    for i in range(5):                                               # lin[i]
        params[f"l{i+1}"], _ = linear(keys[2 + i], trunc, trunc, bias=False)
    params["w3"], params["b3"] = linear(keys[7], trunc, hidden)      # decode[0]
    params["w4"], params["b4"] = linear(keys[8], hidden, N)          # decode[2]
    return params


def prepare_packed_params(params):
    """Fold the affine middle chain (low-rank) and pre-transpose/pad/cast ONCE."""
    w1, b1 = params["w1"], params["b1"]   # (H, N), (H,)
    w2, b2 = params["w2"], params["b2"]   # (T, H), (T,)
    w3, b3 = params["w3"], params["b3"]   # (H, T), (H,)
    w4, b4 = params["w4"], params["b4"]   # (N, H), (N,)
    H, N = w1.shape
    T = w2.shape[0]

    # z @ l1^T @ ... @ l5^T == z @ (l5 l4 l3 l2 l1)^T
    Lchain = (params["l5"] @ params["l4"] @ params["l3"]
              @ params["l2"] @ params["l1"])                 # (T, T)

    # (h1 @ w2^T + b2) @ Lchain^T @ w3^T + b3
    #   == h1 @ A^T @ w3^T + bmid   with   A = Lchain @ w2,  bmid = w3 @ (Lchain @ b2) + b3
    A = Lchain @ w2                                          # (T, H) low-rank factor
    bmid = w3 @ (Lchain @ b2) + b3                           # (H,)

    N_PAD = _round_up(N, 128)
    H_PAD = _round_up(H, 128)   # 500 -> 512
    T_PAD = _round_up(T, 128)   # trunc -> 128

    def pad2(a, rows, cols, dtype):
        return jnp.pad(a, ((0, rows - a.shape[0]), (0, cols - a.shape[1]))).astype(dtype)

    def pad_row(a, cols):
        return jnp.pad(a, (0, cols - a.shape[0]))[None, :].astype(jnp.float32)

    bf16 = jnp.bfloat16
    # Zero-padded rows/cols cancel the sigmoid(0)=0.5 artefact in padded lanes, so
    # results are exact up to bf16 quantization of the matmul operands.
    return {
        "w1t": pad2(w1.T, N_PAD, H_PAD, bf16),
        "b1": pad_row(b1, H_PAD),
        "at": pad2(A.T, H_PAD, T_PAD, bf16),
        "w3t": pad2(w3.T, T_PAD, H_PAD, bf16),
        "bmid": pad_row(bmid, H_PAD),
        "w4t": pad2(w4.T, H_PAD, N_PAD, bf16),
        "b4": pad_row(b4, N_PAD),
        "n": N, "n_pad": N_PAD, "h_pad": H_PAD, "t_pad": T_PAD,
    }


# ---------------------------------------------------------------------------
# Batch tiling: pad to a multiple of 8 only; pick the largest tile (<= max_tile)
# that divides B_pad, preferring >=2 grid steps so both v7x TensorCores engage.
# ---------------------------------------------------------------------------
def _pick_batch_tiling(B, max_tile=512, min_steps=2):
    B_pad = _round_up(max(B, 1), 8)
    best = None
    for cand in range(min(max_tile, B_pad), 7, -8):
        if B_pad % cand == 0:
            if best is None:
                best = cand                     # largest divisor (grid may be 1)
            if B_pad // cand >= min_steps:
                return B_pad, cand              # largest divisor with >=2 steps
    return B_pad, (best if best is not None else 8)


# ---------------------------------------------------------------------------
# Forward: batch-gridded pallas_call with VMEM-resident bf16 weights.
# ---------------------------------------------------------------------------
@functools.partial(jax.jit, static_argnames=("batch_tile",))
def _forward_impl(y_pad, w1t, b1, at, w3t, bmid, w4t, b4, *, batch_tile):
    B_pad, N_PAD = y_pad.shape
    H_PAD = w1t.shape[1]
    T_PAD = at.shape[1]
    BT = batch_tile
    grid = (B_pad // BT,)

    # 128-lane-padded output block: unmasked, lane-dense stores (do not regress to 64).
    act_spec = pl.BlockSpec((BT, N_PAD), lambda i: (i, 0))

    def resident(arr):
        # Constant index_map -> the block stays VMEM-resident across the batch grid.
        return pl.BlockSpec(arr.shape, lambda i: (0, 0))

    args = (y_pad, w1t, b1, at, w3t, bmid, w4t, b4)
    cost = pl.CostEstimate(
        flops=2 * B_pad * (N_PAD * H_PAD + H_PAD * T_PAD + T_PAD * H_PAD + H_PAD * N_PAD),
        transcendentals=2 * B_pad * H_PAD,
        bytes_accessed=int(sum(int(a.size) * a.dtype.itemsize for a in args)
                           + B_pad * N_PAD * 4),
    )

    return pl.pallas_call(
        autoencoder_kernel,
        out_shape=jax.ShapeDtypeStruct((B_pad, N_PAD), y_pad.dtype),
        grid_spec=pltpu.PrefetchScalarGridSpec(
            num_scalar_prefetch=0,
            grid=grid,
            in_specs=[act_spec] + [resident(a) for a in args[1:]],
            out_specs=act_spec,
        ),
        compiler_params=pltpu.CompilerParams(
            dimension_semantics=("parallel",),      # splits batch across v7x's 2 TCs
            vmem_limit_bytes=48 * 1024 * 1024,      # fits v7x 64 MiB physical
        ),
        cost_estimate=cost,
    )(*args)


def autoencoder_forward(y, packed, *, max_batch_tile=512):
    B, N = y.shape
    assert N == packed["n"], "input feature dim mismatch"
    N_PAD = packed["n_pad"]

    B_pad, BT = _pick_batch_tiling(B, max_tile=max_batch_tile)
    y_pad = jnp.pad(y, ((0, B_pad - B), (0, N_PAD - N)))
    out_pad = _forward_impl(y_pad, packed["w1t"], packed["b1"], packed["at"],
                            packed["w3t"], packed["bmid"], packed["w4t"],
                            packed["b4"], batch_tile=BT)
    return out_pad[:B, :N]


# ---------------------------------------------------------------------------
# References.
# ---------------------------------------------------------------------------
def reference_forward(y, params):
    """Exact f32, unfolded: mirrors the PyTorch module structure."""
    h = jax.nn.sigmoid(y @ params["w1"].T + params["b1"])
    z = h @ params["w2"].T + params["b2"]
    for i in range(5):
        z = z @ params[f"l{i+1}"].T
    h2 = jax.nn.sigmoid(z @ params["w3"].T + params["b3"])
    return h2 @ params["w4"].T + params["b4"]


def packed_reference_forward(y, packed):
    """Quantization-matched reference: same bf16 folded weights, plain XLA ops."""
    f32, bf16 = jnp.float32, jnp.bfloat16
    N, N_PAD = packed["n"], packed["n_pad"]
    y_pad = jnp.pad(y, ((0, 0), (0, N_PAD - N))).astype(bf16)
    p1 = jnp.dot(y_pad, packed["w1t"], preferred_element_type=f32) + packed["b1"]
    h1 = jax.nn.sigmoid(p1)
    z = jnp.dot(h1.astype(bf16), packed["at"], preferred_element_type=f32)
    p2 = jnp.dot(z.astype(bf16), packed["w3t"], preferred_element_type=f32) + packed["bmid"]
    h2 = jax.nn.sigmoid(p2)
    out = jnp.dot(h2.astype(bf16), packed["w4t"], preferred_element_type=f32) + packed["b4"]
    return out[:, :N]


if __name__ == "__main__":
    B, N, TRUNC, HIDDEN = 8, 64, 16, 500

    key = jax.random.PRNGKey(0)
    kx, kp = jax.random.split(key)
    y = jax.random.normal(kx, (B, N), jnp.float32)

    params = init_params(kp, N, TRUNC, HIDDEN)
    packed = prepare_packed_params(params)   # one-time fold/transpose/pad/bf16-cast

    out = jax.block_until_ready(autoencoder_forward(y, packed))
    assert out.shape == (B, N)

    # 1) Tight check vs the quantization-matched (bf16 folded weights) XLA reference.
    ref_bf16 = jax.block_until_ready(packed_reference_forward(y, packed))
    assert jnp.allclose(out, ref_bf16, atol=2e-3, rtol=2e-3), "mismatch vs bf16-matched ref"

    # 2) Loose check vs the exact f32 unfolded reference (tolerance deliberately
    #    widened for bf16 MXU operands).
    ref_f32 = jax.block_until_ready(reference_forward(y, params))
    assert float(jnp.max(jnp.abs(out - ref_f32))) < 8e-2, "mismatch vs f32 reference"

    print("KERNEL_OK")
</pallas_src>

<mosaic_0001>
module attributes {stable_mosaic.version = 11 : i64} {
  func.func @autoencoder_kernel(%arg0: i32, %arg1: memref<8x128xf32, #tpu.memory_space<vmem>>, %arg2: memref<128x512xbf16, #tpu.memory_space<vmem>>, %arg3: memref<1x512xf32, #tpu.memory_space<vmem>>, %arg4: memref<512x128xbf16, #tpu.memory_space<vmem>>, %arg5: memref<128x512xbf16, #tpu.memory_space<vmem>>, %arg6: memref<1x512xf32, #tpu.memory_space<vmem>>, %arg7: memref<512x128xbf16, #tpu.memory_space<vmem>>, %arg8: memref<1x128xf32, #tpu.memory_space<vmem>>, %arg9: memref<8x128xf32, #tpu.memory_space<vmem>>) attributes {dimension_semantics = [#tpu.dimension_semantics<parallel>], iteration_bounds = array<i64: 1>, scalar_prefetch = 0 : i64, scratch_operands = 0 : i64, tpu.core_type = #tpu.core_type<tc>, window_params = [{transform_indices = @transform_0, window_bounds = array<i64: 8, 128>}, {pipeline_mode = #tpu.pipeline_mode<synchronous>, transform_indices = @transform_1, window_bounds = array<i64: 128, 512>}, {pipeline_mode = #tpu.pipeline_mode<synchronous>, transform_indices = @transform_2, window_bounds = array<i64: 1, 512>}, {pipeline_mode = #tpu.pipeline_mode<synchronous>, transform_indices = @transform_3, window_bounds = array<i64: 512, 128>}, {pipeline_mode = #tpu.pipeline_mode<synchronous>, transform_indices = @transform_4, window_bounds = array<i64: 128, 512>}, {pipeline_mode = #tpu.pipeline_mode<synchronous>, transform_indices = @transform_5, window_bounds = array<i64: 1, 512>}, {pipeline_mode = #tpu.pipeline_mode<synchronous>, transform_indices = @transform_6, window_bounds = array<i64: 512, 128>}, {pipeline_mode = #tpu.pipeline_mode<synchronous>, transform_indices = @transform_7, window_bounds = array<i64: 1, 128>}, {transform_indices = @transform_8, window_bounds = array<i64: 8, 128>}]} {
    %c0 = arith.constant 0 : index
    %c0_0 = arith.constant 0 : index
    %0 = vector.load %arg1[%c0, %c0_0] : memref<8x128xf32, #tpu.memory_space<vmem>>, vector<8x128xf32>
    %1 = arith.truncf %0 : vector<8x128xf32> to vector<8x128xbf16>
    %c0_1 = arith.constant 0 : index
    %c0_2 = arith.constant 0 : index
    %2 = vector.load %arg2[%c0_1, %c0_2] : memref<128x512xbf16, #tpu.memory_space<vmem>>, vector<128x512xbf16>
    %cst = arith.constant dense<0.000000e+00> : vector<8x512xf32>
    %3 = tpu.matmul %1, %2, %cst {dimension_numbers = #tpu.dot_dimension_numbers<[1], [0], [0], [1], [0, 0, 1, 1], [], []>} : vector<8x128xbf16>, vector<128x512xbf16>, vector<8x512xf32> -> vector<8x512xf32>
    %c0_3 = arith.constant 0 : index
    %c0_4 = arith.constant 0 : index
    %4 = vector.load %arg3[%c0_3, %c0_4] : memref<1x512xf32, #tpu.memory_space<vmem>>, vector<1x512xf32>
    %5 = vector.broadcast %4 : vector<1x512xf32> to vector<8x512xf32>
    %6 = arith.addf %3, %5 : vector<8x512xf32>
    %cst_5 = arith.constant 5.000000e-01 : f32
    %7 = vector.broadcast %cst_5 : f32 to vector<8x512xf32>
    %8 = arith.mulf %7, %6 : vector<8x512xf32>
    %9 = math.tanh %8 : vector<8x512xf32>
    %cst_6 = arith.constant 5.000000e-01 : f32
    %10 = vector.broadcast %cst_6 : f32 to vector<8x512xf32>
    %11 = arith.mulf %10, %9 : vector<8x512xf32>
    %cst_7 = arith.constant 5.000000e-01 : f32
    %12 = vector.broadcast %cst_7 : f32 to vector<8x512xf32>
    %13 = arith.addf %11, %12 : vector<8x512xf32>
    %14 = arith.truncf %13 : vector<8x512xf32> to vector<8x512xbf16>
    %c0_8 = arith.constant 0 : index
    %c0_9 = arith.constant 0 : index
    %15 = vector.load %arg4[%c0_8, %c0_9] : memref<512x128xbf16, #tpu.memory_space<vmem>>, vector<512x128xbf16>
    %cst_10 = arith.constant dense<0.000000e+00> : vector<8x128xf32>
    %16 = tpu.matmul %14, %15, %cst_10 {dimension_numbers = #tpu.dot_dimension_numbers<[1], [0], [0], [1], [0, 0, 1, 1], [], []>} : vector<8x512xbf16>, vector<512x128xbf16>, vector<8x128xf32> -> vector<8x128xf32>
    %17 = arith.truncf %16 : vector<8x128xf32> to vector<8x128xbf16>
    %c0_11 = arith.constant 0 : index
    %c0_12 = arith.constant 0 : index
    %18 = vector.load %arg5[%c0_11, %c0_12] : memref<128x512xbf16, #tpu.memory_space<vmem>>, vector<128x512xbf16>
    %cst_13 = arith.constant dense<0.000000e+00> : vector<8x512xf32>
    %19 = tpu.matmul %17, %18, %cst_13 {dimension_numbers = #tpu.dot_dimension_numbers<[1], [0], [0], [1], [0, 0, 1, 1], [], []>} : vector<8x128xbf16>, vector<128x512xbf16>, vector<8x512xf32> -> vector<8x512xf32>
    %c0_14 = arith.constant 0 : index
    %c0_15 = arith.constant 0 : index
    %20 = vector.load %arg6[%c0_14, %c0_15] : memref<1x512xf32, #tpu.memory_space<vmem>>, vector<1x512xf32>
    %21 = vector.broadcast %20 : vector<1x512xf32> to vector<8x512xf32>
    %22 = arith.addf %19, %21 : vector<8x512xf32>
    %cst_16 = arith.constant 5.000000e-01 : f32
    %23 = vector.broadcast %cst_16 : f32 to vector<8x512xf32>
    %24 = arith.mulf %23, %22 : vector<8x512xf32>
    %25 = math.tanh %24 : vector<8x512xf32>
    %cst_17 = arith.constant 5.000000e-01 : f32
    %26 = vector.broadcast %cst_17 : f32 to vector<8x512xf32>
    %27 = arith.mulf %26, %25 : vector<8x512xf32>
    %cst_18 = arith.constant 5.000000e-01 : f32
    %28 = vector.broadcast %cst_18 : f32 to vector<8x512xf32>
    %29 = arith.addf %27, %28 : vector<8x512xf32>
    %30 = arith.truncf %29 : vector<8x512xf32> to vector<8x512xbf16>
    %c0_19 = arith.constant 0 : index
    %c0_20 = arith.constant 0 : index
    %31 = vector.load %arg7[%c0_19, %c0_20] : memref<512x128xbf16, #tpu.memory_space<vmem>>, vector<512x128xbf16>
    %cst_21 = arith.constant dense<0.000000e+00> : vector<8x128xf32>
    %32 = tpu.matmul %30, %31, %cst_21 {dimension_numbers = #tpu.dot_dimension_numbers<[1], [0], [0], [1], [0, 0, 1, 1], [], []>} : vector<8x512xbf16>, vector<512x128xbf16>, vector<8x128xf32> -> vector<8x128xf32>
    %c0_22 = arith.constant 0 : index
    %c0_23 = arith.constant 0 : index
    %33 = vector.load %arg8[%c0_22, %c0_23] : memref<1x128xf32, #tpu.memory_space<vmem>>, vector<1x128xf32>
    %34 = vector.broadcast %33 : vector<1x128xf32> to vector<8x128xf32>
    %35 = arith.addf %32, %34 : vector<8x128xf32>
    %c0_24 = arith.constant 0 : index
    %c0_25 = arith.constant 0 : index
    %36 = vector.load %arg9[%c0_24, %c0_25] : memref<8x128xf32, #tpu.memory_space<vmem>>, vector<8x128xf32>
    tpu.vector_store %arg9[%c0_24, %c0_25], %35 {strides = array<i32>} : memref<8x128xf32, #tpu.memory_space<vmem>>, vector<8x128xf32>,
    return
  }
  func.func @transform_0(%arg0: i32) -> (i32, i32) {
    %c0_i32 = arith.constant 0 : i32
    %c0_i32_0 = arith.constant 0 : i32
    return %arg0, %c0_i32 : i32, i32
  }
  func.func @transform_1(%arg0: i32) -> (i32, i32) {
    %c0_i32 = arith.constant 0 : i32
    %c0_i32_0 = arith.constant 0 : i32
    %c0_i32_1 = arith.constant 0 : i32
    return %c0_i32, %c0_i32_0 : i32, i32
  }
  func.func @transform_2(%arg0: i32) -> (i32, i32) {
    %c0_i32 = arith.constant 0 : i32
    %c0_i32_0 = arith.constant 0 : i32
    %c0_i32_1 = arith.constant 0 : i32
    return %c0_i32, %c0_i32_0 : i32, i32
  }
  func.func @transform_3(%arg0: i32) -> (i32, i32) {
    %c0_i32 = arith.constant 0 : i32
    %c0_i32_0 = arith.constant 0 : i32
    %c0_i32_1 = arith.constant 0 : i32
    return %c0_i32, %c0_i32_0 : i32, i32
  }
  func.func @transform_4(%arg0: i32) -> (i32, i32) {
    %c0_i32 = arith.constant 0 : i32
    %c0_i32_0 = arith.constant 0 : i32
    %c0_i32_1 = arith.constant 0 : i32
    return %c0_i32, %c0_i32_0 : i32, i32
  }
  func.func @transform_5(%arg0: i32) -> (i32, i32) {
    %c0_i32 = arith.constant 0 : i32
    %c0_i32_0 = arith.constant 0 : i32
    %c0_i32_1 = arith.constant 0 : i32
    return %c0_i32, %c0_i32_0 : i32, i32
  }
  func.func @transform_6(%arg0: i32) -> (i32, i32) {
    %c0_i32 = arith.constant 0 : i32
    %c0_i32_0 = arith.constant 0 : i32
    %c0_i32_1 = arith.constant 0 : i32
    return %c0_i32, %c0_i32_0 : i32, i32
  }
  func.func @transform_7(%arg0: i32) -> (i32, i32) {
    %c0_i32 = arith.constant 0 : i32
    %c0_i32_0 = arith.constant 0 : i32
    %c0_i32_1 = arith.constant 0 : i32
    return %c0_i32, %c0_i32_0 : i32, i32
  }
  func.func @transform_8(%arg0: i32) -> (i32, i32) {
    %c0_i32 = arith.constant 0 : i32
    %c0_i32_0 = arith.constant 0 : i32
    return %arg0, %c0_i32 : i32, i32
  }
}

</mosaic_0001>

<llo_original>
// kernel: _forward_impl.1
$region0: #{_forward_impl.1}
  #allocation0 [shape = 'u32[]', space=smem, size = 0x4, offset = 0x4, fixed_abs, tag = 'smem constant byte address 0x4 - core index']
  #allocation1 [shape = 'u32[144,128]{1,0:T(1,128)}', space=vmem, size = 0x12000, scoped, tag = 'internal scratch']
  %s0 = inlined_call_operand.hbm [shape: f32[8,128], index: 0, kind: input, shape index: {}]
  %s1 = inlined_call_operand.hbm [shape: bf16[128,512], index: 1, kind: input, shape index: {}]
  %s2 = inlined_call_operand.vmem [shape: f32[1,512], index: 2, kind: input, shape index: {}]
  %s3 = inlined_call_operand.hbm [shape: bf16[512,128], index: 3, kind: input, shape index: {}]
  %s4 = inlined_call_operand.hbm [shape: bf16[128,512], index: 4, kind: input, shape index: {}]
  %s5 = inlined_call_operand.vmem [shape: f32[1,512], index: 5, kind: input, shape index: {}]
  %s6 = inlined_call_operand.hbm [shape: bf16[512,128], index: 6, kind: input, shape index: {}]
  %s7 = inlined_call_operand.vmem [shape: f32[1,128], index: 7, kind: input, shape index: {}]
  %s8 = inlined_call_operand.hbm [shape: f32[8,128], index: 8, kind: output, shape index: {}]
  %s9 = sld [smem:[#allocation0]]
  $region62: #{_forward_impl.1} parent=0
    _
  %s11 = ssub.s32 1, %s9
  %s12 = scalar_select 0, %s11, %s9
  $region1: #{_forward_impl.1} parent=0
    #allocation2 [shape = 'u8[4096]{0}', space=vmem, size = 0x1000, scoped, tag = 'input window, operand 0, single buffered']
    #allocation3 [shape = 's32[1]{0}', space=sflag, size = 0x4, scoped, tag = 'scoped memory for _forward_impl.1']
    #allocation4 [shape = 's32[1]{0}', space=sflag, size = 0x4, scoped, tag = 'scoped memory for _forward_impl.1']
    #allocation5 [shape = 'u8[131072]{0}', space=vmem, size = 0x20000, scoped, tag = 'input window, operand 1, single buffered']
    #allocation6 [shape = 's32[1]{0}', space=sflag, size = 0x4, scoped, tag = 'scoped memory for _forward_impl.1']
    #allocation7 [shape = 'u8[131072]{0}', space=vmem, size = 0x20000, scoped, tag = 'input window, operand 3, single buffered']
    #allocation8 [shape = 'u8[131072]{0}', space=vmem, size = 0x20000, scoped, tag = 'input window, operand 4, single buffered']
    #allocation9 [shape = 's32[1]{0}', space=sflag, size = 0x4, scoped, tag = 'scoped memory for _forward_impl.1']
    #allocation10 [shape = 'u8[131072]{0}', space=vmem, size = 0x20000, scoped, tag = 'input window, operand 6, single buffered']
    #allocation11 [shape = 'u8[4096]{0}', space=vmem, size = 0x1000, scoped, tag = 'output window, operand 0, single buffered']
    %13 = vsyncpa [#allocation3], 0
    %14 = vsyncpa [#allocation6], 0
    %15 = vsyncpa [#allocation9], 0
    %16 = vsyncpa [#allocation4], 0
    // Predicated region
    $region2: #{_forward_impl.1} parent=1 // pred_check
      _
    $region3: #{_forward_impl.1} parent=1 // pred_check_branch
      %18 = sbr.rel (0) target = $region5
    $region4: #{_forward_impl.1} parent=1 // pred_region
      %s20 = ssub.s32 128, 128
      %21 = vsyncadd [#allocation3], %s20
      %s23 = sshll.u32 [#allocation2], 4
      %s24 = int_to_ptr.vmem [resolvable:$true] %s23
      %26 = dma.hbm_to_vmem [thread:$0]  %s0, 128, %s24, [#allocation3]
    $region5: #{_forward_impl.1} parent=1 // pred_fallthru
      _
    // Predicated region
    $region6: #{_forward_impl.1} parent=1 // pred_check
      _
    $region7: #{_forward_impl.1} parent=1 // pred_check_branch
      %28 = sbr.rel (0) target = $region9
    $region8: #{_forward_impl.1} parent=1 // pred_region
      %s30 = ssub.s32 4096, 4096
      %31 = vsyncadd [#allocation6], %s30
      %s32 = sshll.u32 [#allocation5], 4
      %s33 = int_to_ptr.vmem [resolvable:$true] %s32
      %38 = dma.hbm_to_vmem [thread:$0]  %s1, 4096, %s33, [#allocation6], 256, 256, 16
    $region9: #{_forward_impl.1} parent=1 // pred_fallthru
      _
    // Predicated region
    $region10: #{_forward_impl.1} parent=1 // pred_check
      _
    $region11: #{_forward_impl.1} parent=1 // pred_check_branch
      %40 = sbr.rel (0) target = $region13
    $region12: #{_forward_impl.1} parent=1 // pred_region
      _
    $region13: #{_forward_impl.1} parent=1 // pred_fallthru
      _
    // Predicated region
    $region14: #{_forward_impl.1} parent=1 // pred_check
      _
    $region15: #{_forward_impl.1} parent=1 // pred_check_branch
      %42 = sbr.rel (0) target = $region17
    $region16: #{_forward_impl.1} parent=1 // pred_region
      %s44 = ssub.s32 4096, 4096
      %45 = vsyncadd [#allocation6], %s44
      %s46 = sshll.u32 [#allocation7], 4
      %s47 = int_to_ptr.vmem [resolvable:$true] %s46
      %52 = dma.hbm_to_vmem [thread:$0]  %s3, 4096, %s47, [#allocation6], 64, 64, 4
    $region17: #{_forward_impl.1} parent=1 // pred_fallthru
      _
    // Predicated region
    $region18: #{_forward_impl.1} parent=1 // pred_check
      _
    $region19: #{_forward_impl.1} parent=1 // pred_check_branch
      %54 = sbr.rel (0) target = $region21
    $region20: #{_forward_impl.1} parent=1 // pred_region
      %s56 = ssub.s32 4096, 4096
      %57 = vsyncadd [#allocation9], %s56
      %s58 = sshll.u32 [#allocation8], 4
      %s59 = int_to_ptr.vmem [resolvable:$true] %s58
      %64 = dma.hbm_to_vmem [thread:$0]  %s4, 4096, %s59, [#allocation9], 256, 256, 16
    $region21: #{_forward_impl.1} parent=1 // pred_fallthru
      _
    // Predicated region
    $region22: #{_forward_impl.1} parent=1 // pred_check
      _
    $region23: #{_forward_impl.1} parent=1 // pred_check_branch
      %66 = sbr.rel (0) target = $region25
    $region24: #{_forward_impl.1} parent=1 // pred_region
      _
    $region25: #{_forward_impl.1} parent=1 // pred_fallthru
      _
    // Predicated region
    $region26: #{_forward_impl.1} parent=1 // pred_check
      _
    $region27: #{_forward_impl.1} parent=1 // pred_check_branch
      %68 = sbr.rel (0) target = $region29
    $region28: #{_forward_impl.1} parent=1 // pred_region
      %s70 = ssub.s32 4096, 4096
      %71 = vsyncadd [#allocation9], %s70
      %s72 = sshll.u32 [#allocation10], 4
      %s73 = int_to_ptr.vmem [resolvable:$true] %s72
      %78 = dma.hbm_to_vmem [thread:$0]  %s6, 4096, %s73, [#allocation9], 64, 64, 4
    $region29: #{_forward_impl.1} parent=1 // pred_fallthru
      _
    // Predicated region
    $region30: #{_forward_impl.1} parent=1 // pred_check
      _
    $region31: #{_forward_impl.1} parent=1 // pred_check_branch
      %80 = sbr.rel (0) target = $region33
    $region32: #{_forward_impl.1} parent=1 // pred_region
      _
    $region33: #{_forward_impl.1} parent=1 // pred_fallthru
      _
    // Predicated region
    $region34: #{_forward_impl.1} parent=1 // pred_check
      _
    $region35: #{_forward_impl.1} parent=1 // pred_check_branch
      %82 = sbr.rel (0) target = $region37
    $region36: #{_forward_impl.1} parent=1 // pred_region
      %83 = dma.done [#allocation3], 128
    $region37: #{_forward_impl.1} parent=1 // pred_fallthru
      _
    // Predicated region
    $region38: #{_forward_impl.1} parent=1 // pred_check
      _
    $region39: #{_forward_impl.1} parent=1 // pred_check_branch
      %85 = sbr.rel (0) target = $region41
    $region40: #{_forward_impl.1} parent=1 // pred_region
      %86 = dma.done [#allocation6], 4096
    $region41: #{_forward_impl.1} parent=1 // pred_fallthru
      _
    // Predicated region
    $region42: #{_forward_impl.1} parent=1 // pred_check
      _
    $region43: #{_forward_impl.1} parent=1 // pred_check_branch
      %88 = sbr.rel (0) target = $region45
    $region44: #{_forward_impl.1} parent=1 // pred_region
      %89 = dma.done [#allocation6], 4096
    $region45: #{_forward_impl.1} parent=1 // pred_fallthru
      _
    // Predicated region
    $region46: #{_forward_impl.1} parent=1 // pred_check
      _
    $region47: #{_forward_impl.1} parent=1 // pred_check_branch
      %91 = sbr.rel (0) target = $region49
    $region48: #{_forward_impl.1} parent=1 // pred_region
      %92 = dma.done [#allocation9], 4096
    $region49: #{_forward_impl.1} parent=1 // pred_fallthru
      _
    // Predicated region
    $region50: #{_forward_impl.1} parent=1 // pred_check
      _
    $region51: #{_forward_impl.1} parent=1 // pred_check_branch
      %94 = sbr.rel (0) target = $region53
    $region52: #{_forward_impl.1} parent=1 // pred_region
      %95 = dma.done [#allocation9], 4096
    $region53: #{_forward_impl.1} parent=1 // pred_fallthru
      _
    %v97 = vld [vmem:[#allocation2] sm:$0xff]
    %v98 = vpack.c.bf16 %v97, %v97
    %v99 = vld [vmem:[#allocation5] sm:$0xff]
    %v100 = vld [vmem:[#allocation5 + $0x8] sm:$0xff]
    %v101 = vld [vmem:[#allocation5 + $0x10] sm:$0xff]
    %v102 = vld [vmem:[#allocation5 + $0x18] sm:$0xff]
    %v103 = vld [vmem:[#allocation5 + $0x20] sm:$0xff]
    %v104 = vld [vmem:[#allocation5 + $0x28] sm:$0xff]
    %v105 = vld [vmem:[#allocation5 + $0x30] sm:$0xff]
    %v106 = vld [vmem:[#allocation5 + $0x38] sm:$0xff]
    %v107 = vld [vmem:[#allocation5 + $0x40] sm:$0xff]
    %v108 = vld [vmem:[#allocation5 + $0x48] sm:$0xff]
    %v109 = vld [vmem:[#allocation5 + $0x50] sm:$0xff]
    %v110 = vld [vmem:[#allocation5 + $0x58] sm:$0xff]
    %v111 = vld [vmem:[#allocation5 + $0x60] sm:$0xff]
    %v112 = vld [vmem:[#allocation5 + $0x68] sm:$0xff]
    %v113 = vld [vmem:[#allocation5 + $0x70] sm:$0xff]
    %v114 = vld [vmem:[#allocation5 + $0x78] sm:$0xff]
    %v115 = vld [vmem:[#allocation5 + $0x80] sm:$0xff]
    %v116 = vld [vmem:[#allocation5 + $0x88] sm:$0xff]
    %v117 = vld [vmem:[#allocation5 + $0x90] sm:$0xff]
    %v118 = vld [vmem:[#allocation5 + $0x98] sm:$0xff]
    %v119 = vld [vmem:[#allocation5 + $0xa0] sm:$0xff]
    %v120 = vld [vmem:[#allocation5 + $0xa8] sm:$0xff]
    %v121 = vld [vmem:[#allocation5 + $0xb0] sm:$0xff]
    %v122 = vld [vmem:[#allocation5 + $0xb8] sm:$0xff]
    %v123 = vld [vmem:[#allocation5 + $0xc0] sm:$0xff]
    %v124 = vld [vmem:[#allocation5 + $0xc8] sm:$0xff]
    %v125 = vld [vmem:[#allocation5 + $0xd0] sm:$0xff]
    %v126 = vld [vmem:[#allocation5 + $0xd8] sm:$0xff]
    %v127 = vld [vmem:[#allocation5 + $0xe0] sm:$0xff]
    %v128 = vld [vmem:[#allocation5 + $0xe8] sm:$0xff]
    %v129 = vld [vmem:[#allocation5 + $0xf0] sm:$0xff]
    %v130 = vld [vmem:[#allocation5 + $0xf8] sm:$0xff]
    %v131 = vld [vmem:[%s2] sm:$0xf]
    %v133 = vlaneseq
    %v134 = vshrl.u32 %v133, 7
    %v135 = vsub.s32 0, %v134
    %v136 = vrot.slane %v131, %v135
    %v137 = vlaneseq
    %v138 = vshrl.u32 %v137, 7
    %v139 = vsub.s32 1, %v138
    %v140 = vrot.slane %v131, %v139
    %v141 = vlaneseq
    %v142 = vshrl.u32 %v141, 7
    %v143 = vsub.s32 2, %v142
    %v144 = vrot.slane %v131, %v143
    %v145 = vlaneseq
    %v146 = vshrl.u32 %v145, 7
    %v147 = vsub.s32 3, %v146
    %v148 = vrot.slane %v131, %v147
    %v185 = vunpack.c.l.b16 %v99
    %v186 = vunpack.c.h.b16 %v99
    %v187 = vunpack.c.l.b16 %v100
    %v188 = vunpack.c.h.b16 %v100
    %v189 = vunpack.c.l.b16 %v101
    %v190 = vunpack.c.h.b16 %v101
    %v191 = vunpack.c.l.b16 %v102
    %v192 = vunpack.c.h.b16 %v102
    %v193 = vunpack.c.l.b16 %v103
    %v194 = vunpack.c.h.b16 %v103
    %v195 = vunpack.c.l.b16 %v104
    %v196 = vunpack.c.h.b16 %v104
    %v197 = vunpack.c.l.b16 %v105
    %v198 = vunpack.c.h.b16 %v105
    %v199 = vunpack.c.l.b16 %v106
    %v200 = vunpack.c.h.b16 %v106
    %v201 = vunpack.c.l.b16 %v107
    %v202 = vunpack.c.h.b16 %v107
    %v203 = vunpack.c.l.b16 %v108
    %v204 = vunpack.c.h.b16 %v108
    %v205 = vunpack.c.l.b16 %v109
    %v206 = vunpack.c.h.b16 %v109
    %v207 = vunpack.c.l.b16 %v110
    %v208 = vunpack.c.h.b16 %v110
    %v209 = vunpack.c.l.b16 %v111
    %v210 = vunpack.c.h.b16 %v111
    %v211 = vunpack.c.l.b16 %v112
    %v212 = vunpack.c.h.b16 %v112
    %v213 = vunpack.c.l.b16 %v113
    %v214 = vunpack.c.h.b16 %v113
    %v215 = vunpack.c.l.b16 %v114
    %v216 = vunpack.c.h.b16 %v114
    %v217 = vunpack.c.l.b16 %v115
    %v218 = vunpack.c.h.b16 %v115
    %v219 = vunpack.c.l.b16 %v116
    %v220 = vunpack.c.h.b16 %v116
    %v221 = vunpack.c.l.b16 %v117
    %v222 = vunpack.c.h.b16 %v117
    %v223 = vunpack.c.l.b16 %v118
    %v224 = vunpack.c.h.b16 %v118
    %v225 = vunpack.c.l.b16 %v119
    %v226 = vunpack.c.h.b16 %v119
    %v227 = vunpack.c.l.b16 %v120
    %v228 = vunpack.c.h.b16 %v120
    %v229 = vunpack.c.l.b16 %v121
    %v230 = vunpack.c.h.b16 %v121
    %v231 = vunpack.c.l.b16 %v122
    %v232 = vunpack.c.h.b16 %v122
    %v233 = vunpack.c.l.b16 %v123
    %v234 = vunpack.c.h.b16 %v123
    %v235 = vunpack.c.l.b16 %v124
    %v236 = vunpack.c.h.b16 %v124
    %v237 = vunpack.c.l.b16 %v125
    %v238 = vunpack.c.h.b16 %v125
    %v239 = vunpack.c.l.b16 %v126
    %v240 = vunpack.c.h.b16 %v126
    %v241 = vunpack.c.l.b16 %v127
    %v242 = vunpack.c.h.b16 %v127
    %v243 = vunpack.c.l.b16 %v128
    %v244 = vunpack.c.h.b16 %v128
    %v245 = vunpack.c.l.b16 %v129
    %v246 = vunpack.c.h.b16 %v129
    %v247 = vunpack.c.l.b16 %v130
    %v248 = vunpack.c.h.b16 %v130
    %v249 = vpack.c.b16 %v189, %v185
    %v250 = vpack.c.b16 %v190, %v186
    %v251 = vpack.c.b16 %v191, %v187
    %v252 = vpack.c.b16 %v192, %v188
    %v253 = vpack.c.b16 %v197, %v193
    %v254 = vpack.c.b16 %v198, %v194
    %v255 = vpack.c.b16 %v199, %v195
    %v256 = vpack.c.b16 %v200, %v196
    %v257 = vpack.c.b16 %v205, %v201
    %v258 = vpack.c.b16 %v206, %v202
    %v259 = vpack.c.b16 %v207, %v203
    %v260 = vpack.c.b16 %v208, %v204
    %v261 = vpack.c.b16 %v213, %v209
    %v262 = vpack.c.b16 %v214, %v210
    %v263 = vpack.c.b16 %v215, %v211
    %v264 = vpack.c.b16 %v216, %v212
    %v265 = vpack.c.b16 %v221, %v217
    %v266 = vpack.c.b16 %v222, %v218
    %v267 = vpack.c.b16 %v223, %v219
    %v268 = vpack.c.b16 %v224, %v220
    %v269 = vpack.c.b16 %v229, %v225
    %v270 = vpack.c.b16 %v230, %v226
    %v271 = vpack.c.b16 %v231, %v227
    %v272 = vpack.c.b16 %v232, %v228
    %v273 = vpack.c.b16 %v237, %v233
    %v274 = vpack.c.b16 %v238, %v234
    %v275 = vpack.c.b16 %v239, %v235
    %v276 = vpack.c.b16 %v240, %v236
    %v277 = vpack.c.b16 %v245, %v241
    %v278 = vpack.c.b16 %v246, %v242
    %v279 = vpack.c.b16 %v247, %v243
    %v280 = vpack.c.b16 %v248, %v244
    %313 = vmatprep.subr.bf16.mxu0 %v250
    %314 = vmatpush1.bf16.msra.mxu0 %v249
    %315 = vmatprep.subr.bf16.mxu0 %v254
    %316 = vmatpush1.bf16.msra.mxu0 %v253
    %317 = vmatprep.subr.bf16.mxu0 %v258
    %318 = vmatpush1.bf16.msra.mxu0 %v257
    %319 = vmatprep.subr.bf16.mxu0 %v262
    %320 = vmatpush1.bf16.msra.mxu0 %v261
    %321 = vmatprep.subr.bf16.mxu0 %v266
    %322 = vmatpush1.bf16.msra.mxu0 %v265
    %323 = vmatprep.subr.bf16.mxu0 %v270
    %324 = vmatpush1.bf16.msra.mxu0 %v269
    %325 = vmatprep.subr.bf16.mxu0 %v274
    %326 = vmatpush1.bf16.msra.mxu0 %v273
    %327 = vmatprep.subr.bf16.mxu0 %v278
    %328 = vmatpush1.bf16.msra.mxu0 %v277
    %329 = vmatprep.subr.bf16.mxu0 0
    %330 = vmatpush1.bf16.msra.mxu0 0
    %331 = vmatprep.subr.bf16.mxu0 0
    %332 = vmatpush1.bf16.msra.mxu0 0
    %333 = vmatprep.subr.bf16.mxu0 0
    %334 = vmatpush1.bf16.msra.mxu0 0
    %335 = vmatprep.subr.bf16.mxu0 0
    %336 = vmatpush1.bf16.msra.mxu0 0
    %337 = vmatprep.subr.bf16.mxu0 0
    %338 = vmatpush1.bf16.msra.mxu0 0
    %339 = vmatprep.subr.bf16.mxu0 0
    %340 = vmatpush1.bf16.msra.mxu0 0
    %341 = vmatprep.subr.bf16.mxu0 0
    %342 = vmatpush1.bf16.msra.mxu0 0
    %343 = vmatprep.subr.bf16.mxu0 0
    %344 = vmatpush1.bf16.msra.mxu0 0
    %345 = vmatprep.mubr.bf16.mxu0 0
    %346 = vmatmul.mubr.bf16.gmra.mrb[0].mxu0 %v98
    %v347 = vpop.f32.mrb[0].mxu0
    %v348 = vadd.f32 %v136, %v347
    %v349 = vpop.f32.mrb[0].mxu0
    %v350 = vadd.f32 %v140, %v349
    %v351 = vpop.f32.mrb[0].mxu0
    %v352 = vpop.f32.mrb[0].mxu0
    %353 = vdwg.mxu0
    %354 = vmatprep.subr.bf16.mxu0 %v252
    %355 = vmatpush1.bf16.msra.mxu0 %v251
    %356 = vmatprep.subr.bf16.mxu0 %v256
    %357 = vmatpush1.bf16.msra.mxu0 %v255
    %358 = vmatprep.subr.bf16.mxu0 %v260
    %359 = vmatpush1.bf16.msra.mxu0 %v259
    %360 = vmatprep.subr.bf16.mxu0 %v264
    %361 = vmatpush1.bf16.msra.mxu0 %v263
    %362 = vmatprep.subr.bf16.mxu0 %v268
    %363 = vmatpush1.bf16.msra.mxu0 %v267
    %364 = vmatprep.subr.bf16.mxu0 %v272
    %365 = vmatpush1.bf16.msra.mxu0 %v271
    %366 = vmatprep.subr.bf16.mxu0 %v276
    %367 = vmatpush1.bf16.msra.mxu0 %v275
    %368 = vmatprep.subr.bf16.mxu0 %v280
    %369 = vmatpush1.bf16.msra.mxu0 %v279
    %370 = vmatprep.subr.bf16.mxu0 0
    %371 = vmatpush1.bf16.msra.mxu0 0
    %372 = vmatprep.subr.bf16.mxu0 0
    %373 = vmatpush1.bf16.msra.mxu0 0
    %374 = vmatprep.subr.bf16.mxu0 0
    %375 = vmatpush1.bf16.msra.mxu0 0
    %376 = vmatprep.subr.bf16.mxu0 0
    %377 = vmatpush1.bf16.msra.mxu0 0
    %378 = vmatprep.subr.bf16.mxu0 0
    %379 = vmatpush1.bf16.msra.mxu0 0
    %380 = vmatprep.subr.bf16.mxu0 0
    %381 = vmatpush1.bf16.msra.mxu0 0
    %382 = vmatprep.subr.bf16.mxu0 0
    %383 = vmatpush1.bf16.msra.mxu0 0
    %384 = vmatprep.subr.bf16.mxu0 0
    %385 = vmatpush1.bf16.msra.mxu0 0
    %386 = vmatprep.mubr.bf16.mxu0 0
    %387 = vmatmul.mubr.bf16.gmra.mrb[0].mxu0 %v98
    %v388 = vpop.f32.mrb[0].mxu0
    %v389 = vadd.f32 %v144, %v388
    %v390 = vpop.f32.mrb[0].mxu0
    %v391 = vadd.f32 %v148, %v390
    %v392 = vpop.f32.mrb[0].mxu0
    %v393 = vpop.f32.mrb[0].mxu0
    %394 = vdwg.mxu0
    %v395 = vmul.f32 %v348, 0.5
    %v396 = vmul.f32 %v350, 0.5
    %v397 = vmul.f32 %v389, 0.5
    %v398 = vmul.f32 %v391, 0.5
    %v399 = vtanh.pop %v395
    %v400 = vtanh.pop %v396
    %v401 = vtanh.pop %v397
    %v402 = vtanh.pop %v398
    %v403 = vmul.f32 %v399, 0.5
    %v404 = vmul.f32 %v400, 0.5
    %v405 = vmul.f32 %v401, 0.5
    %v406 = vmul.f32 %v402, 0.5
    %v407 = vadd.f32 %v403, 0.5
    %v408 = vadd.f32 %v404, 0.5
    %v409 = vadd.f32 %v405, 0.5
    %v410 = vadd.f32 %v406, 0.5
    %v411 = vpack.c.bf16 %v407, %v407
    %v412 = vpack.c.bf16 %v408, %v408
    %v413 = vpack.c.bf16 %v409, %v409
    %v414 = vpack.c.bf16 %v410, %v410
    %v415 = vld [vmem:[#allocation7] sm:$0xf]
    %v416 = vld [vmem:[#allocation7 + $0x4] sm:$0xf]
    %v417 = vld [vmem:[#allocation7 + $0x8] sm:$0xf]
    %v418 = vld [vmem:[#allocation7 + $0xc] sm:$0xf]
    %v419 = vld [vmem:[#allocation7 + $0x10] sm:$0xf]
    %v420 = vld [vmem:[#allocation7 + $0x14] sm:$0xf]
    %v421 = vld [vmem:[#allocation7 + $0x18] sm:$0xf]
    %v422 = vld [vmem:[#allocation7 + $0x1c] sm:$0xf]
    %v423 = vld [vmem:[#allocation7 + $0x20] sm:$0xf]
    %v424 = vld [vmem:[#allocation7 + $0x24] sm:$0xf]
    %v425 = vld [vmem:[#allocation7 + $0x28] sm:$0xf]
    %v426 = vld [vmem:[#allocation7 + $0x2c] sm:$0xf]
    %v427 = vld [vmem:[#allocation7 + $0x30] sm:$0xf]
    %v428 = vld [vmem:[#allocation7 + $0x34] sm:$0xf]
    %v429 = vld [vmem:[#allocation7 + $0x38] sm:$0xf]
    %v430 = vld [vmem:[#allocation7 + $0x3c] sm:$0xf]
    %v431 = vld [vmem:[#allocation7 + $0x40] sm:$0xf]
    %v432 = vld [vmem:[#allocation7 + $0x44] sm:$0xf]
    %v433 = vld [vmem:[#allocation7 + $0x48] sm:$0xf]
    %v434 = vld [vmem:[#allocation7 + $0x4c] sm:$0xf]
    %v435 = vld [vmem:[#allocation7 + $0x50] sm:$0xf]
    %v436 = vld [vmem:[#allocation7 + $0x54] sm:$0xf]
    %v437 = vld [vmem:[#allocation7 + $0x58] sm:$0xf]
    %v438 = vld [vmem:[#allocation7 + $0x5c] sm:$0xf]
    %v439 = vld [vmem:[#allocation7 + $0x60] sm:$0xf]
    %v440 = vld [vmem:[#allocation7 + $0x64] sm:$0xf]
    %v441 = vld [vmem:[#allocation7 + $0x68] sm:$0xf]
    %v442 = vld [vmem:[#allocation7 + $0x6c] sm:$0xf]
    %v443 = vld [vmem:[#allocation7 + $0x70] sm:$0xf]
    %v444 = vld [vmem:[#allocation7 + $0x74] sm:$0xf]
    %v445 = vld [vmem:[#allocation7 + $0x78] sm:$0xf]
    %v446 = vld [vmem:[#allocation7 + $0x7c] sm:$0xf]
    %v447 = vld [vmem:[#allocation7 + $0x80] sm:$0xf]
    %v448 = vld [vmem:[#allocation7 + $0x84] sm:$0xf]
    %v449 = vld [vmem:[#allocation7 + $0x88] sm:$0xf]
    %v450 = vld [vmem:[#allocation7 + $0x8c] sm:$0xf]
    %v451 = vld [vmem:[#allocation7 + $0x90] sm:$0xf]
    %v452 = vld [vmem:[#allocation7 + $0x94] sm:$0xf]
    %v453 = vld [vmem:[#allocation7 + $0x98] sm:$0xf]
    %v454 = vld [vmem:[#allocation7 + $0x9c] sm:$0xf]
    %v455 = vld [vmem:[#allocation7 + $0xa0] sm:$0xf]
    %v456 = vld [vmem:[#allocation7 + $0xa4] sm:$0xf]
    %v457 = vld [vmem:[#allocation7 + $0xa8] sm:$0xf]
    %v458 = vld [vmem:[#allocation7 + $0xac] sm:$0xf]
    %v459 = vld [vmem:[#allocation7 + $0xb0] sm:$0xf]
    %v460 = vld [vmem:[#allocation7 + $0xb4] sm:$0xf]
    %v461 = vld [vmem:[#allocation7 + $0xb8] sm:$0xf]
    %v462 = vld [vmem:[#allocation7 + $0xbc] sm:$0xf]
    %v463 = vld [vmem:[#allocation7 + $0xc0] sm:$0xf]
    %v464 = vld [vmem:[#allocation7 + $0xc4] sm:$0xf]
    %v465 = vld [vmem:[#allocation7 + $0xc8] sm:$0xf]
    %v466 = vld [vmem:[#allocation7 + $0xcc] sm:$0xf]
    %v467 = vld [vmem:[#allocation7 + $0xd0] sm:$0xf]
    %v468 = vld [vmem:[#allocation7 + $0xd4] sm:$0xf]
    %v469 = vld [vmem:[#allocation7 + $0xd8] sm:$0xf]
    %v470 = vld [vmem:[#allocation7 + $0xdc] sm:$0xf]
    %v471 = vld [vmem:[#allocation7 + $0xe0] sm:$0xf]
    %v472 = vld [vmem:[#allocation7 + $0xe4] sm:$0xf]
    %v473 = vld [vmem:[#allocation7 + $0xe8] sm:$0xf]
    %v474 = vld [vmem:[#allocation7 + $0xec] sm:$0xf]
    %v475 = vld [vmem:[#allocation7 + $0xf0] sm:$0xf]
    %v476 = vld [vmem:[#allocation7 + $0xf4] sm:$0xf]
    %v477 = vld [vmem:[#allocation7 + $0xf8] sm:$0xf]
    %v478 = vld [vmem:[#allocation7 + $0xfc] sm:$0xf]
    %v543 = vunpack.c.l.b16 %v415
    %v544 = vunpack.c.l.b16 %v416
    %v545 = vunpack.c.l.b16 %v417
    %v546 = vunpack.c.l.b16 %v418
    %v547 = vunpack.c.l.b16 %v419
    %v548 = vunpack.c.l.b16 %v420
    %v549 = vunpack.c.l.b16 %v421
    %v550 = vunpack.c.l.b16 %v422
    %v551 = vunpack.c.l.b16 %v423
    %v552 = vunpack.c.l.b16 %v424
    %v553 = vunpack.c.l.b16 %v425
    %v554 = vunpack.c.l.b16 %v426
    %v555 = vunpack.c.l.b16 %v427
    %v556 = vunpack.c.l.b16 %v428
    %v557 = vunpack.c.l.b16 %v429
    %v558 = vunpack.c.l.b16 %v430
    %v559 = vunpack.c.l.b16 %v431
    %v560 = vunpack.c.l.b16 %v432
    %v561 = vunpack.c.l.b16 %v433
    %v562 = vunpack.c.l.b16 %v434
    %v563 = vunpack.c.l.b16 %v435
    %v564 = vunpack.c.l.b16 %v436
    %v565 = vunpack.c.l.b16 %v437
    %v566 = vunpack.c.l.b16 %v438
    %v567 = vunpack.c.l.b16 %v439
    %v568 = vunpack.c.l.b16 %v440
    %v569 = vunpack.c.l.b16 %v441
    %v570 = vunpack.c.l.b16 %v442
    %v571 = vunpack.c.l.b16 %v443
    %v572 = vunpack.c.l.b16 %v444
    %v573 = vunpack.c.l.b16 %v445
    %v574 = vunpack.c.l.b16 %v446
    %v575 = vunpack.c.l.b16 %v447
    %v576 = vunpack.c.l.b16 %v448
    %v577 = vunpack.c.l.b16 %v449
    %v578 = vunpack.c.l.b16 %v450
    %v579 = vunpack.c.l.b16 %v451
    %v580 = vunpack.c.l.b16 %v452
    %v581 = vunpack.c.l.b16 %v453
    %v582 = vunpack.c.l.b16 %v454
    %v583 = vunpack.c.l.b16 %v455
    %v584 = vunpack.c.l.b16 %v456
    %v585 = vunpack.c.l.b16 %v457
    %v586 = vunpack.c.l.b16 %v458
    %v587 = vunpack.c.l.b16 %v459
    %v588 = vunpack.c.l.b16 %v460
    %v589 = vunpack.c.l.b16 %v461
    %v590 = vunpack.c.l.b16 %v462
    %v591 = vunpack.c.l.b16 %v463
    %v592 = vunpack.c.l.b16 %v464
    %v593 = vunpack.c.l.b16 %v465
    %v594 = vunpack.c.l.b16 %v466
    %v595 = vunpack.c.l.b16 %v467
    %v596 = vunpack.c.l.b16 %v468
    %v597 = vunpack.c.l.b16 %v469
    %v598 = vunpack.c.l.b16 %v470
    %v599 = vunpack.c.l.b16 %v471
    %v600 = vunpack.c.l.b16 %v472
    %v601 = vunpack.c.l.b16 %v473
    %v602 = vunpack.c.l.b16 %v474
    %v603 = vunpack.c.l.b16 %v475
    %v604 = vunpack.c.l.b16 %v476
    %v605 = vunpack.c.l.b16 %v477
    %v606 = vunpack.c.l.b16 %v478
    %v607 = vpack.c.b16 %v544, %v543
    %v608 = vpack.c.b16 %v546, %v545
    %v609 = vpack.c.b16 %v548, %v547
    %v610 = vpack.c.b16 %v550, %v549
    %v611 = vpack.c.b16 %v552, %v551
    %v612 = vpack.c.b16 %v554, %v553
    %v613 = vpack.c.b16 %v556, %v555
    %v614 = vpack.c.b16 %v558, %v557
    %v615 = vpack.c.b16 %v560, %v559
    %v616 = vpack.c.b16 %v562, %v561
    %v617 = vpack.c.b16 %v564, %v563
    %v618 = vpack.c.b16 %v566, %v565
    %v619 = vpack.c.b16 %v568, %v567
    %v620 = vpack.c.b16 %v570, %v569
    %v621 = vpack.c.b16 %v572, %v571
    %v622 = vpack.c.b16 %v574, %v573
    %v623 = vpack.c.b16 %v576, %v575
    %v624 = vpack.c.b16 %v578, %v577
    %v625 = vpack.c.b16 %v580, %v579
    %v626 = vpack.c.b16 %v582, %v581
    %v627 = vpack.c.b16 %v584, %v583
    %v628 = vpack.c.b16 %v586, %v585
    %v629 = vpack.c.b16 %v588, %v587
    %v630 = vpack.c.b16 %v590, %v589
    %v631 = vpack.c.b16 %v592, %v591
    %v632 = vpack.c.b16 %v594, %v593
    %v633 = vpack.c.b16 %v596, %v595
    %v634 = vpack.c.b16 %v598, %v597
    %v635 = vpack.c.b16 %v600, %v599
    %v636 = vpack.c.b16 %v602, %v601
    %v637 = vpack.c.b16 %v604, %v603
    %v638 = vpack.c.b16 %v606, %v605
    %671 = vmatprep.subr.bf16.mxu0 0
    %672 = vmatpush1.bf16.msra.mxu0 %v607
    %673 = vmatprep.subr.bf16.mxu0 0
    %674 = vmatpush1.bf16.msra.mxu0 %v608
    %675 = vmatprep.subr.bf16.mxu0 0
    %676 = vmatpush1.bf16.msra.mxu0 %v609
    %677 = vmatprep.subr.bf16.mxu0 0
    %678 = vmatpush1.bf16.msra.mxu0 %v610
    %679 = vmatprep.subr.bf16.mxu0 0
    %680 = vmatpush1.bf16.msra.mxu0 %v611
    %681 = vmatprep.subr.bf16.mxu0 0
    %682 = vmatpush1.bf16.msra.mxu0 %v612
    %683 = vmatprep.subr.bf16.mxu0 0
    %684 = vmatpush1.bf16.msra.mxu0 %v613
    %685 = vmatprep.subr.bf16.mxu0 0
    %686 = vmatpush1.bf16.msra.mxu0 %v614
    %687 = vmatprep.subr.bf16.mxu0 0
    %688 = vmatpush1.bf16.msra.mxu0 %v615
    %689 = vmatprep.subr.bf16.mxu0 0
    %690 = vmatpush1.bf16.msra.mxu0 %v616
    %691 = vmatprep.subr.bf16.mxu0 0
    %692 = vmatpush1.bf16.msra.mxu0 %v617
    %693 = vmatprep.subr.bf16.mxu0 0
    %694 = vmatpush1.bf16.msra.mxu0 %v618
    %695 = vmatprep.subr.bf16.mxu0 0
    %696 = vmatpush1.bf16.msra.mxu0 %v619
    %697 = vmatprep.subr.bf16.mxu0 0
    %698 = vmatpush1.bf16.msra.mxu0 %v620
    %699 = vmatprep.subr.bf16.mxu0 0
    %700 = vmatpush1.bf16.msra.mxu0 %v621
    %701 = vmatprep.subr.bf16.mxu0 0
    %702 = vmatpush1.bf16.msra.mxu0 %v622
    %703 = vmatprep.mubr.bf16.mxu0 %v412
    %704 = vmatmul.mubr.bf16.gmra.mrb[0].mxu0 %v411
    %v705 = vpop.f32.mrb[0].mxu0
    %v706 = vadd.f32 0.0, %v705
    %v707 = vpop.f32.mrb[0].mxu0
    %v708 = vpop.f32.mrb[0].mxu0
    %v709 = vpop.f32.mrb[0].mxu0
    %710 = vdwg.mxu0
    %711 = vmatprep.subr.bf16.mxu0 0
    %712 = vmatpush1.bf16.msra.mxu0 %v623
    %713 = vmatprep.subr.bf16.mxu0 0
    %714 = vmatpush1.bf16.msra.mxu0 %v624
    %715 = vmatprep.subr.bf16.mxu0 0
    %716 = vmatpush1.bf16.msra.mxu0 %v625
    %717 = vmatprep.subr.bf16.mxu0 0
    %718 = vmatpush1.bf16.msra.mxu0 %v626
    %719 = vmatprep.subr.bf16.mxu0 0
    %720 = vmatpush1.bf16.msra.mxu0 %v627
    %721 = vmatprep.subr.bf16.mxu0 0
    %722 = vmatpush1.bf16.msra.mxu0 %v628
    %723 = vmatprep.subr.bf16.mxu0 0
    %724 = vmatpush1.bf16.msra.mxu0 %v629
    %725 = vmatprep.subr.bf16.mxu0 0
    %726 = vmatpush1.bf16.msra.mxu0 %v630
    %727 = vmatprep.subr.bf16.mxu0 0
    %728 = vmatpush1.bf16.msra.mxu0 %v631
    %729 = vmatprep.subr.bf16.mxu0 0
    %730 = vmatpush1.bf16.msra.mxu0 %v632
    %731 = vmatprep.subr.bf16.mxu0 0
    %732 = vmatpush1.bf16.msra.mxu0 %v633
    %733 = vmatprep.subr.bf16.mxu0 0
    %734 = vmatpush1.bf16.msra.mxu0 %v634
    %735 = vmatprep.subr.bf16.mxu0 0
    %736 = vmatpush1.bf16.msra.mxu0 %v635
    %737 = vmatprep.subr.bf16.mxu0 0
    %738 = vmatpush1.bf16.msra.mxu0 %v636
    %739 = vmatprep.subr.bf16.mxu0 0
    %740 = vmatpush1.bf16.msra.mxu0 %v637
    %741 = vmatprep.subr.bf16.mxu0 0
    %742 = vmatpush1.bf16.msra.mxu0 %v638
    %743 = vmatprep.mubr.bf16.mxu0 %v414
    %744 = vmatmul.mubr.bf16.gmra.mrb[0].mxu0 %v413
    %v745 = vpop.f32.mrb[0].mxu0
    %v746 = vadd.f32 %v706, %v745
    %v747 = vpop.f32.mrb[0].mxu0
    %v748 = vpop.f32.mrb[0].mxu0
    %v749 = vpop.f32.mrb[0].mxu0
    %750 = vdwg.mxu0
    %v751 = vpack.c.bf16 %v746, %v746
    %v752 = vld [vmem:[#allocation8] sm:$0xff]
    %v753 = vld [vmem:[#allocation8 + $0x8] sm:$0xff]
    %v754 = vld [vmem:[#allocation8 + $0x10] sm:$0xff]
    %v755 = vld [vmem:[#allocation8 + $0x18] sm:$0xff]
    %v756 = vld [vmem:[#allocation8 + $0x20] sm:$0xff]
    %v757 = vld [vmem:[#allocation8 + $0x28] sm:$0xff]
    %v758 = vld [vmem:[#allocation8 + $0x30] sm:$0xff]
    %v759 = vld [vmem:[#allocation8 + $0x38] sm:$0xff]
    %v760 = vld [vmem:[#allocation8 + $0x40] sm:$0xff]
    %v761 = vld [vmem:[#allocation8 + $0x48] sm:$0xff]
    %v762 = vld [vmem:[#allocation8 + $0x50] sm:$0xff]
    %v763 = vld [vmem:[#allocation8 + $0x58] sm:$0xff]
    %v764 = vld [vmem:[#allocation8 + $0x60] sm:$0xff]
    %v765 = vld [vmem:[#allocation8 + $0x68] sm:$0xff]
    %v766 = vld [vmem:[#allocation8 + $0x70] sm:$0xff]
    %v767 = vld [vmem:[#allocation8 + $0x78] sm:$0xff]
    %v768 = vld [vmem:[#allocation8 + $0x80] sm:$0xff]
    %v769 = vld [vmem:[#allocation8 + $0x88] sm:$0xff]
    %v770 = vld [vmem:[#allocation8 + $0x90] sm:$0xff]
    %v771 = vld [vmem:[#allocation8 + $0x98] sm:$0xff]
    %v772 = vld [vmem:[#allocation8 + $0xa0] sm:$0xff]
    %v773 = vld [vmem:[#allocation8 + $0xa8] sm:$0xff]
    %v774 = vld [vmem:[#allocation8 + $0xb0] sm:$0xff]
    %v775 = vld [vmem:[#allocation8 + $0xb8] sm:$0xff]
    %v776 = vld [vmem:[#allocation8 + $0xc0] sm:$0xff]
    %v777 = vld [vmem:[#allocation8 + $0xc8] sm:$0xff]
    %v778 = vld [vmem:[#allocation8 + $0xd0] sm:$0xff]
    %v779 = vld [vmem:[#allocation8 + $0xd8] sm:$0xff]
    %v780 = vld [vmem:[#allocation8 + $0xe0] sm:$0xff]
    %v781 = vld [vmem:[#allocation8 + $0xe8] sm:$0xff]
    %v782 = vld [vmem:[#allocation8 + $0xf0] sm:$0xff]
    %v783 = vld [vmem:[#allocation8 + $0xf8] sm:$0xff]
    %v784 = vld [vmem:[%s5] sm:$0xf]
    %v786 = vlaneseq
    %v787 = vshrl.u32 %v786, 7
    %v788 = vsub.s32 0, %v787
    %v789 = vrot.slane %v784, %v788
    %v790 = vlaneseq
    %v791 = vshrl.u32 %v790, 7
    %v792 = vsub.s32 1, %v791
    %v793 = vrot.slane %v784, %v792
    %v794 = vlaneseq
    %v795 = vshrl.u32 %v794, 7
    %v796 = vsub.s32 2, %v795
    %v797 = vrot.slane %v784, %v796
    %v798 = vlaneseq
    %v799 = vshrl.u32 %v798, 7
    %v800 = vsub.s32 3, %v799
    %v801 = vrot.slane %v784, %v800
    %v838 = vunpack.c.l.b16 %v752
    %v839 = vunpack.c.h.b16 %v752
    %v840 = vunpack.c.l.b16 %v753
    %v841 = vunpack.c.h.b16 %v753
    %v842 = vunpack.c.l.b16 %v754
    %v843 = vunpack.c.h.b16 %v754
    %v844 = vunpack.c.l.b16 %v755
    %v845 = vunpack.c.h.b16 %v755
    %v846 = vunpack.c.l.b16 %v756
    %v847 = vunpack.c.h.b16 %v756
    %v848 = vunpack.c.l.b16 %v757
    %v849 = vunpack.c.h.b16 %v757
    %v850 = vunpack.c.l.b16 %v758
    %v851 = vunpack.c.h.b16 %v758
    %v852 = vunpack.c.l.b16 %v759
    %v853 = vunpack.c.h.b16 %v759
    %v854 = vunpack.c.l.b16 %v760
    %v855 = vunpack.c.h.b16 %v760
    %v856 = vunpack.c.l.b16 %v761
    %v857 = vunpack.c.h.b16 %v761
    %v858 = vunpack.c.l.b16 %v762
    %v859 = vunpack.c.h.b16 %v762
    %v860 = vunpack.c.l.b16 %v763
    %v861 = vunpack.c.h.b16 %v763
    %v862 = vunpack.c.l.b16 %v764
    %v863 = vunpack.c.h.b16 %v764
    %v864 = vunpack.c.l.b16 %v765
    %v865 = vunpack.c.h.b16 %v765
    %v866 = vunpack.c.l.b16 %v766
    %v867 = vunpack.c.h.b16 %v766
    %v868 = vunpack.c.l.b16 %v767
    %v869 = vunpack.c.h.b16 %v767
    %v870 = vunpack.c.l.b16 %v768
    %v871 = vunpack.c.h.b16 %v768
    %v872 = vunpack.c.l.b16 %v769
    %v873 = vunpack.c.h.b16 %v769
    %v874 = vunpack.c.l.b16 %v770
    %v875 = vunpack.c.h.b16 %v770
    %v876 = vunpack.c.l.b16 %v771
    %v877 = vunpack.c.h.b16 %v771
    %v878 = vunpack.c.l.b16 %v772
    %v879 = vunpack.c.h.b16 %v772
    %v880 = vunpack.c.l.b16 %v773
    %v881 = vunpack.c.h.b16 %v773
    %v882 = vunpack.c.l.b16 %v774
    %v883 = vunpack.c.h.b16 %v774
    %v884 = vunpack.c.l.b16 %v775
    %v885 = vunpack.c.h.b16 %v775
    %v886 = vunpack.c.l.b16 %v776
    %v887 = vunpack.c.h.b16 %v776
    %v888 = vunpack.c.l.b16 %v777
    %v889 = vunpack.c.h.b16 %v777
    %v890 = vunpack.c.l.b16 %v778
    %v891 = vunpack.c.h.b16 %v778
    %v892 = vunpack.c.l.b16 %v779
    %v893 = vunpack.c.h.b16 %v779
    %v894 = vunpack.c.l.b16 %v780
    %v895 = vunpack.c.h.b16 %v780
    %v896 = vunpack.c.l.b16 %v781
    %v897 = vunpack.c.h.b16 %v781
    %v898 = vunpack.c.l.b16 %v782
    %v899 = vunpack.c.h.b16 %v782
    %v900 = vunpack.c.l.b16 %v783
    %v901 = vunpack.c.h.b16 %v783
    %v902 = vpack.c.b16 %v842, %v838
    %v903 = vpack.c.b16 %v843, %v839
    %v904 = vpack.c.b16 %v844, %v840
    %v905 = vpack.c.b16 %v845, %v841
    %v906 = vpack.c.b16 %v850, %v846
    %v907 = vpack.c.b16 %v851, %v847
    %v908 = vpack.c.b16 %v852, %v848
    %v909 = vpack.c.b16 %v853, %v849
    %v910 = vpack.c.b16 %v858, %v854
    %v911 = vpack.c.b16 %v859, %v855
    %v912 = vpack.c.b16 %v860, %v856
    %v913 = vpack.c.b16 %v861, %v857
    %v914 = vpack.c.b16 %v866, %v862
    %v915 = vpack.c.b16 %v867, %v863
    %v916 = vpack.c.b16 %v868, %v864
    %v917 = vpack.c.b16 %v869, %v865
    %v918 = vpack.c.b16 %v874, %v870
    %v919 = vpack.c.b16 %v875, %v871
    %v920 = vpack.c.b16 %v876, %v872
    %v921 = vpack.c.b16 %v877, %v873
    %v922 = vpack.c.b16 %v882, %v878
    %v923 = vpack.c.b16 %v883, %v879
    %v924 = vpack.c.b16 %v884, %v880
    %v925 = vpack.c.b16 %v885, %v881
    %v926 = vpack.c.b16 %v890, %v886
    %v927 = vpack.c.b16 %v891, %v887
    %v928 = vpack.c.b16 %v892, %v888
    %v929 = vpack.c.b16 %v893, %v889
    %v930 = vpack.c.b16 %v898, %v894
    %v931 = vpack.c.b16 %v899, %v895
    %v932 = vpack.c.b16 %v900, %v896
    %v933 = vpack.c.b16 %v901, %v897
    %966 = vmatprep.subr.bf16.mxu0 %v903
    %967 = vmatpush1.bf16.msra.mxu0 %v902
    %968 = vmatprep.subr.bf16.mxu0 %v907
    %969 = vmatpush1.bf16.msra.mxu0 %v906
    %970 = vmatprep.subr.bf16.mxu0 %v911
    %971 = vmatpush1.bf16.msra.mxu0 %v910
    %972 = vmatprep.subr.bf16.mxu0 %v915
    %973 = vmatpush1.bf16.msra.mxu0 %v914
    %974 = vmatprep.subr.bf16.mxu0 %v919
    %975 = vmatpush1.bf16.msra.mxu0 %v918
    %976 = vmatprep.subr.bf16.mxu0 %v923
    %977 = vmatpush1.bf16.msra.mxu0 %v922
    %978 = vmatprep.subr.bf16.mxu0 %v927
    %979 = vmatpush1.bf16.msra.mxu0 %v926
    %980 = vmatprep.subr.bf16.mxu0 %v931
    %981 = vmatpush1.bf16.msra.mxu0 %v930
    %982 = vmatprep.subr.bf16.mxu0 0
    %983 = vmatpush1.bf16.msra.mxu0 0
    %984 = vmatprep.subr.bf16.mxu0 0
    %985 = vmatpush1.bf16.msra.mxu0 0
    %986 = vmatprep.subr.bf16.mxu0 0
    %987 = vmatpush1.bf16.msra.mxu0 0
    %988 = vmatprep.subr.bf16.mxu0 0
    %989 = vmatpush1.bf16.msra.mxu0 0
    %990 = vmatprep.subr.bf16.mxu0 0
    %991 = vmatpush1.bf16.msra.mxu0 0
    %992 = vmatprep.subr.bf16.mxu0 0
    %993 = vmatpush1.bf16.msra.mxu0 0
    %994 = vmatprep.subr.bf16.mxu0 0
    %995 = vmatpush1.bf16.msra.mxu0 0
    %996 = vmatprep.subr.bf16.mxu0 0
    %997 = vmatpush1.bf16.msra.mxu0 0
    %998 = vmatprep.mubr.bf16.mxu0 0
    %999 = vmatmul.mubr.bf16.gmra.mrb[0].mxu0 %v751
    %v1000 = vpop.f32.mrb[0].mxu0
    %v1001 = vadd.f32 %v789, %v1000
    %v1002 = vpop.f32.mrb[0].mxu0
    %v1003 = vadd.f32 %v793, %v1002
    %v1004 = vpop.f32.mrb[0].mxu0
    %v1005 = vpop.f32.mrb[0].mxu0
    %1006 = vdwg.mxu0
    %1007 = vmatprep.subr.bf16.mxu0 %v905
    %1008 = vmatpush1.bf16.msra.mxu0 %v904
    %1009 = vmatprep.subr.bf16.mxu0 %v909
    %1010 = vmatpush1.bf16.msra.mxu0 %v908
    %1011 = vmatprep.subr.bf16.mxu0 %v913
    %1012 = vmatpush1.bf16.msra.mxu0 %v912
    %1013 = vmatprep.subr.bf16.mxu0 %v917
    %1014 = vmatpush1.bf16.msra.mxu0 %v916
    %1015 = vmatprep.subr.bf16.mxu0 %v921
    %1016 = vmatpush1.bf16.msra.mxu0 %v920
    %1017 = vmatprep.subr.bf16.mxu0 %v925
    %1018 = vmatpush1.bf16.msra.mxu0 %v924
    %1019 = vmatprep.subr.bf16.mxu0 %v929
    %1020 = vmatpush1.bf16.msra.mxu0 %v928
    %1021 = vmatprep.subr.bf16.mxu0 %v933
    %1022 = vmatpush1.bf16.msra.mxu0 %v932
    %1023 = vmatprep.subr.bf16.mxu0 0
    %1024 = vmatpush1.bf16.msra.mxu0 0
    %1025 = vmatprep.subr.bf16.mxu0 0
    %1026 = vmatpush1.bf16.msra.mxu0 0
    %1027 = vmatprep.subr.bf16.mxu0 0
    %1028 = vmatpush1.bf16.msra.mxu0 0
    %1029 = vmatprep.subr.bf16.mxu0 0
    %1030 = vmatpush1.bf16.msra.mxu0 0
    %1031 = vmatprep.subr.bf16.mxu0 0
    %1032 = vmatpush1.bf16.msra.mxu0 0
    %1033 = vmatprep.subr.bf16.mxu0 0
    %1034 = vmatpush1.bf16.msra.mxu0 0
    %1035 = vmatprep.subr.bf16.mxu0 0
    %1036 = vmatpush1.bf16.msra.mxu0 0
    %1037 = vmatprep.subr.bf16.mxu0 0
    %1038 = vmatpush1.bf16.msra.mxu0 0
    %1039 = vmatprep.mubr.bf16.mxu0 0
    %1040 = vmatmul.mubr.bf16.gmra.mrb[0].mxu0 %v751
    %v1041 = vpop.f32.mrb[0].mxu0
    %v1042 = vadd.f32 %v797, %v1041
    %v1043 = vpop.f32.mrb[0].mxu0
    %v1044 = vadd.f32 %v801, %v1043
    %v1045 = vpop.f32.mrb[0].mxu0
    %v1046 = vpop.f32.mrb[0].mxu0
    %1047 = vdwg.mxu0
    %v1048 = vmul.f32 %v1001, 0.5
    %v1049 = vmul.f32 %v1003, 0.5
    %v1050 = vmul.f32 %v1042, 0.5
    %v1051 = vmul.f32 %v1044, 0.5
    %v1052 = vtanh.pop %v1048
    %v1053 = vtanh.pop %v1049
    %v1054 = vtanh.pop %v1050
    %v1055 = vtanh.pop %v1051
    %v1056 = vmul.f32 %v1052, 0.5
    %v1057 = vmul.f32 %v1053, 0.5
    %v1058 = vmul.f32 %v1054, 0.5
    %v1059 = vmul.f32 %v1055, 0.5
    %v1060 = vadd.f32 %v1056, 0.5
    %v1061 = vadd.f32 %v1057, 0.5
    %v1062 = vadd.f32 %v1058, 0.5
    %v1063 = vadd.f32 %v1059, 0.5
    %v1064 = vpack.c.bf16 %v1060, %v1060
    %v1065 = vpack.c.bf16 %v1061, %v1061
    %v1066 = vpack.c.bf16 %v1062, %v1062
    %v1067 = vpack.c.bf16 %v1063, %v1063
    %v1068 = vld [vmem:[#allocation10] sm:$0xf]
    %v1069 = vld [vmem:[#allocation10 + $0x4] sm:$0xf]
    %v1070 = vld [vmem:[#allocation10 + $0x8] sm:$0xf]
    %v1071 = vld [vmem:[#allocation10 + $0xc] sm:$0xf]
    %v1072 = vld [vmem:[#allocation10 + $0x10] sm:$0xf]
    %v1073 = vld [vmem:[#allocation10 + $0x14] sm:$0xf]
    %v1074 = vld [vmem:[#allocation10 + $0x18] sm:$0xf]
    %v1075 = vld [vmem:[#allocation10 + $0x1c] sm:$0xf]
    %v1076 = vld [vmem:[#allocation10 + $0x20] sm:$0xf]
    %v1077 = vld [vmem:[#allocation10 + $0x24] sm:$0xf]
    %v1078 = vld [vmem:[#allocation10 + $0x28] sm:$0xf]
    %v1079 = vld [vmem:[#allocation10 + $0x2c] sm:$0xf]
    %v1080 = vld [vmem:[#allocation10 + $0x30] sm:$0xf]
    %v1081 = vld [vmem:[#allocation10 + $0x34] sm:$0xf]
    %v1082 = vld [vmem:[#allocation10 + $0x38] sm:$0xf]
    %v1083 = vld [vmem:[#allocation10 + $0x3c] sm:$0xf]
    %v1084 = vld [vmem:[#allocation10 + $0x40] sm:$0xf]
    %v1085 = vld [vmem:[#allocation10 + $0x44] sm:$0xf]
    %v1086 = vld [vmem:[#allocation10 + $0x48] sm:$0xf]
    %v1087 = vld [vmem:[#allocation10 + $0x4c] sm:$0xf]
    %v1088 = vld [vmem:[#allocation10 + $0x50] sm:$0xf]
    %v1089 = vld [vmem:[#allocation10 + $0x54] sm:$0xf]
    %v1090 = vld [vmem:[#allocation10 + $0x58] sm:$0xf]
    %v1091 = vld [vmem:[#allocation10 + $0x5c] sm:$0xf]
    %v1092 = vld [vmem:[#allocation10 + $0x60] sm:$0xf]
    %v1093 = vld [vmem:[#allocation10 + $0x64] sm:$0xf]
    %v1094 = vld [vmem:[#allocation10 + $0x68] sm:$0xf]
    %v1095 = vld [vmem:[#allocation10 + $0x6c] sm:$0xf]
    %v1096 = vld [vmem:[#allocation10 + $0x70] sm:$0xf]
    %v1097 = vld [vmem:[#allocation10 + $0x74] sm:$0xf]
    %v1098 = vld [vmem:[#allocation10 + $0x78] sm:$0xf]
    %v1099 = vld [vmem:[#allocation10 + $0x7c] sm:$0xf]
    %v1100 = vld [vmem:[#allocation10 + $0x80] sm:$0xf]
    %v1101 = vld [vmem:[#allocation10 + $0x84] sm:$0xf]
    %v1102 = vld [vmem:[#allocation10 + $0x88] sm:$0xf]
    %v1103 = vld [vmem:[#allocation10 + $0x8c] sm:$0xf]
    %v1104 = vld [vmem:[#allocation10 + $0x90] sm:$0xf]
    %v1105 = vld [vmem:[#allocation10 + $0x94] sm:$0xf]
    %v1106 = vld [vmem:[#allocation10 + $0x98] sm:$0xf]
    %v1107 = vld [vmem:[#allocation10 + $0x9c] sm:$0xf]
    %v1108 = vld [vmem:[#allocation10 + $0xa0] sm:$0xf]
    %v1109 = vld [vmem:[#allocation10 + $0xa4] sm:$0xf]
    %v1110 = vld [vmem:[#allocation10 + $0xa8] sm:$0xf]
    %v1111 = vld [vmem:[#allocation10 + $0xac] sm:$0xf]
    %v1112 = vld [vmem:[#allocation10 + $0xb0] sm:$0xf]
    %v1113 = vld [vmem:[#allocation10 + $0xb4] sm:$0xf]
    %v1114 = vld [vmem:[#allocation10 + $0xb8] sm:$0xf]
    %v1115 = vld [vmem:[#allocation10 + $0xbc] sm:$0xf]
    %v1116 = vld [vmem:[#allocation10 + $0xc0] sm:$0xf]
    %v1117 = vld [vmem:[#allocation10 + $0xc4] sm:$0xf]
    %v1118 = vld [vmem:[#allocation10 + $0xc8] sm:$0xf]
    %v1119 = vld [vmem:[#allocation10 + $0xcc] sm:$0xf]
    %v1120 = vld [vmem:[#allocation10 + $0xd0] sm:$0xf]
    %v1121 = vld [vmem:[#allocation10 + $0xd4] sm:$0xf]
    %v1122 = vld [vmem:[#allocation10 + $0xd8] sm:$0xf]
    %v1123 = vld [vmem:[#allocation10 + $0xdc] sm:$0xf]
    %v1124 = vld [vmem:[#allocation10 + $0xe0] sm:$0xf]
    %v1125 = vld [vmem:[#allocation10 + $0xe4] sm:$0xf]
    %v1126 = vld [vmem:[#allocation10 + $0xe8] sm:$0xf]
    %v1127 = vld [vmem:[#allocation10 + $0xec] sm:$0xf]
    %v1128 = vld [vmem:[#allocation10 + $0xf0] sm:$0xf]
    %v1129 = vld [vmem:[#allocation10 + $0xf4] sm:$0xf]
    %v1130 = vld [vmem:[#allocation10 + $0xf8] sm:$0xf]
    %v1131 = vld [vmem:[#allocation10 + $0xfc] sm:$0xf]
    %v1132 = vld [vmem:[%s7] sm:$0x1]
    %v1134 = vlaneseq
    %v1135 = vshrl.u32 %v1134, 7
    %v1136 = vsub.s32 0, %v1135
    %v1137 = vrot.slane %v1132, %v1136
    %v1203 = vunpack.c.l.b16 %v1068
    %v1204 = vunpack.c.l.b16 %v1069
    %v1205 = vunpack.c.l.b16 %v1070
    %v1206 = vunpack.c.l.b16 %v1071
    %v1207 = vunpack.c.l.b16 %v1072
    %v1208 = vunpack.c.l.b16 %v1073
    %v1209 = vunpack.c.l.b16 %v1074
    %v1210 = vunpack.c.l.b16 %v1075
    %v1211 = vunpack.c.l.b16 %v1076
    %v1212 = vunpack.c.l.b16 %v1077
    %v1213 = vunpack.c.l.b16 %v1078
    %v1214 = vunpack.c.l.b16 %v1079
    %v1215 = vunpack.c.l.b16 %v1080
    %v1216 = vunpack.c.l.b16 %v1081
    %v1217 = vunpack.c.l.b16 %v1082
    %v1218 = vunpack.c.l.b16 %v1083
    %v1219 = vunpack.c.l.b16 %v1084
    %v1220 = vunpack.c.l.b16 %v1085
    %v1221 = vunpack.c.l.b16 %v1086
    %v1222 = vunpack.c.l.b16 %v1087
    %v1223 = vunpack.c.l.b16 %v1088
    %v1224 = vunpack.c.l.b16 %v1089
    %v1225 = vunpack.c.l.b16 %v1090
    %v1226 = vunpack.c.l.b16 %v1091
    %v1227 = vunpack.c.l.b16 %v1092
    %v1228 = vunpack.c.l.b16 %v1093
    %v1229 = vunpack.c.l.b16 %v1094
    %v1230 = vunpack.c.l.b16 %v1095
    %v1231 = vunpack.c.l.b16 %v1096
    %v1232 = vunpack.c.l.b16 %v1097
    %v1233 = vunpack.c.l.b16 %v1098
    %v1234 = vunpack.c.l.b16 %v1099
    %v1235 = vunpack.c.l.b16 %v1100
    %v1236 = vunpack.c.l.b16 %v1101
    %v1237 = vunpack.c.l.b16 %v1102
    %v1238 = vunpack.c.l.b16 %v1103
    %v1239 = vunpack.c.l.b16 %v1104
    %v1240 = vunpack.c.l.b16 %v1105
    %v1241 = vunpack.c.l.b16 %v1106
    %v1242 = vunpack.c.l.b16 %v1107
    %v1243 = vunpack.c.l.b16 %v1108
    %v1244 = vunpack.c.l.b16 %v1109
    %v1245 = vunpack.c.l.b16 %v1110
    %v1246 = vunpack.c.l.b16 %v1111
    %v1247 = vunpack.c.l.b16 %v1112
    %v1248 = vunpack.c.l.b16 %v1113
    %v1249 = vunpack.c.l.b16 %v1114
    %v1250 = vunpack.c.l.b16 %v1115
    %v1251 = vunpack.c.l.b16 %v1116
    %v1252 = vunpack.c.l.b16 %v1117
    %v1253 = vunpack.c.l.b16 %v1118
    %v1254 = vunpack.c.l.b16 %v1119
    %v1255 = vunpack.c.l.b16 %v1120
    %v1256 = vunpack.c.l.b16 %v1121
    %v1257 = vunpack.c.l.b16 %v1122
    %v1258 = vunpack.c.l.b16 %v1123
    %v1259 = vunpack.c.l.b16 %v1124
    %v1260 = vunpack.c.l.b16 %v1125
    %v1261 = vunpack.c.l.b16 %v1126
    %v1262 = vunpack.c.l.b16 %v1127
    %v1263 = vunpack.c.l.b16 %v1128
    %v1264 = vunpack.c.l.b16 %v1129
    %v1265 = vunpack.c.l.b16 %v1130
    %v1266 = vunpack.c.l.b16 %v1131
    %v1267 = vpack.c.b16 %v1204, %v1203
    %v1268 = vpack.c.b16 %v1206, %v1205
    %v1269 = vpack.c.b16 %v1208, %v1207
    %v1270 = vpack.c.b16 %v1210, %v1209
    %v1271 = vpack.c.b16 %v1212, %v1211
    %v1272 = vpack.c.b16 %v1214, %v1213
    %v1273 = vpack.c.b16 %v1216, %v1215
    %v1274 = vpack.c.b16 %v1218, %v1217
    %v1275 = vpack.c.b16 %v1220, %v1219
    %v1276 = vpack.c.b16 %v1222, %v1221
    %v1277 = vpack.c.b16 %v1224, %v1223
    %v1278 = vpack.c.b16 %v1226, %v1225
    %v1279 = vpack.c.b16 %v1228, %v1227
    %v1280 = vpack.c.b16 %v1230, %v1229
    %v1281 = vpack.c.b16 %v1232, %v1231
    %v1282 = vpack.c.b16 %v1234, %v1233
    %v1283 = vpack.c.b16 %v1236, %v1235
    %v1284 = vpack.c.b16 %v1238, %v1237
    %v1285 = vpack.c.b16 %v1240, %v1239
    %v1286 = vpack.c.b16 %v1242, %v1241
    %v1287 = vpack.c.b16 %v1244, %v1243
    %v1288 = vpack.c.b16 %v1246, %v1245
    %v1289 = vpack.c.b16 %v1248, %v1247
    %v1290 = vpack.c.b16 %v1250, %v1249
    %v1291 = vpack.c.b16 %v1252, %v1251
    %v1292 = vpack.c.b16 %v1254, %v1253
    %v1293 = vpack.c.b16 %v1256, %v1255
    %v1294 = vpack.c.b16 %v1258, %v1257
    %v1295 = vpack.c.b16 %v1260, %v1259
    %v1296 = vpack.c.b16 %v1262, %v1261
    %v1297 = vpack.c.b16 %v1264, %v1263
    %v1298 = vpack.c.b16 %v1266, %v1265
    %1331 = vmatprep.subr.bf16.mxu0 0
    %1332 = vmatpush1.bf16.msra.mxu0 %v1267
    %1333 = vmatprep.subr.bf16.mxu0 0
    %1334 = vmatpush1.bf16.msra.mxu0 %v1268
    %1335 = vmatprep.subr.bf16.mxu0 0
    %1336 = vmatpush1.bf16.msra.mxu0 %v1269
    %1337 = vmatprep.subr.bf16.mxu0 0
    %1338 = vmatpush1.bf16.msra.mxu0 %v1270
    %1339 = vmatprep.subr.bf16.mxu0 0
    %1340 = vmatpush1.bf16.msra.mxu0 %v1271
    %1341 = vmatprep.subr.bf16.mxu0 0
    %1342 = vmatpush1.bf16.msra.mxu0 %v1272
    %1343 = vmatprep.subr.bf16.mxu0 0
    %1344 = vmatpush1.bf16.msra.mxu0 %v1273
    %1345 = vmatprep.subr.bf16.mxu0 0
    %1346 = vmatpush1.bf16.msra.mxu0 %v1274
    %1347 = vmatprep.subr.bf16.mxu0 0
    %1348 = vmatpush1.bf16.msra.mxu0 %v1275
    %1349 = vmatprep.subr.bf16.mxu0 0
    %1350 = vmatpush1.bf16.msra.mxu0 %v1276
    %1351 = vmatprep.subr.bf16.mxu0 0
    %1352 = vmatpush1.bf16.msra.mxu0 %v1277
    %1353 = vmatprep.subr.bf16.mxu0 0
    %1354 = vmatpush1.bf16.msra.mxu0 %v1278
    %1355 = vmatprep.subr.bf16.mxu0 0
    %1356 = vmatpush1.bf16.msra.mxu0 %v1279
    %1357 = vmatprep.subr.bf16.mxu0 0
    %1358 = vmatpush1.bf16.msra.mxu0 %v1280
    %1359 = vmatprep.subr.bf16.mxu0 0
    %1360 = vmatpush1.bf16.msra.mxu0 %v1281
    %1361 = vmatprep.subr.bf16.mxu0 0
    %1362 = vmatpush1.bf16.msra.mxu0 %v1282
    %1363 = vmatprep.mubr.bf16.mxu0 %v1065
    %1364 = vmatmul.mubr.bf16.gmra.mrb[0].mxu0 %v1064
    %v1365 = vpop.f32.mrb[0].mxu0
    %v1366 = vadd.f32 %v1137, %v1365
    %v1367 = vpop.f32.mrb[0].mxu0
    %v1368 = vpop.f32.mrb[0].mxu0
    %v1369 = vpop.f32.mrb[0].mxu0
    %1370 = vdwg.mxu0
    %1371 = vmatprep.subr.bf16.mxu0 0
    %1372 = vmatpush1.bf16.msra.mxu0 %v1283
    %1373 = vmatprep.subr.bf16.mxu0 0
    %1374 = vmatpush1.bf16.msra.mxu0 %v1284
    %1375 = vmatprep.subr.bf16.mxu0 0
    %1376 = vmatpush1.bf16.msra.mxu0 %v1285
    %1377 = vmatprep.subr.bf16.mxu0 0
    %1378 = vmatpush1.bf16.msra.mxu0 %v1286
    %1379 = vmatprep.subr.bf16.mxu0 0
    %1380 = vmatpush1.bf16.msra.mxu0 %v1287
    %1381 = vmatprep.subr.bf16.mxu0 0
    %1382 = vmatpush1.bf16.msra.mxu0 %v1288
    %1383 = vmatprep.subr.bf16.mxu0 0
    %1384 = vmatpush1.bf16.msra.mxu0 %v1289
    %1385 = vmatprep.subr.bf16.mxu0 0
    %1386 = vmatpush1.bf16.msra.mxu0 %v1290
    %1387 = vmatprep.subr.bf16.mxu0 0
    %1388 = vmatpush1.bf16.msra.mxu0 %v1291
    %1389 = vmatprep.subr.bf16.mxu0 0
    %1390 = vmatpush1.bf16.msra.mxu0 %v1292
    %1391 = vmatprep.subr.bf16.mxu0 0
    %1392 = vmatpush1.bf16.msra.mxu0 %v1293
    %1393 = vmatprep.subr.bf16.mxu0 0
    %1394 = vmatpush1.bf16.msra.mxu0 %v1294
    %1395 = vmatprep.subr.bf16.mxu0 0
    %1396 = vmatpush1.bf16.msra.mxu0 %v1295
    %1397 = vmatprep.subr.bf16.mxu0 0
    %1398 = vmatpush1.bf16.msra.mxu0 %v1296
    %1399 = vmatprep.subr.bf16.mxu0 0
    %1400 = vmatpush1.bf16.msra.mxu0 %v1297
    %1401 = vmatprep.subr.bf16.mxu0 0
    %1402 = vmatpush1.bf16.msra.mxu0 %v1298
    %1403 = vmatprep.mubr.bf16.mxu0 %v1067
    %1404 = vmatmul.mubr.bf16.gmra.mrb[0].mxu0 %v1066
    %v1405 = vpop.f32.mrb[0].mxu0
    %v1406 = vadd.f32 %v1366, %v1405
    %v1407 = vpop.f32.mrb[0].mxu0
    %v1408 = vpop.f32.mrb[0].mxu0
    %v1409 = vpop.f32.mrb[0].mxu0
    %1410 = vdwg.mxu0
    %1411 = vst [vmem:[#allocation11] sm:$0xff] %v1406
    // Predicated region
    $region54: #{_forward_impl.1} parent=1 // pred_check
      _
    $region55: #{_forward_impl.1} parent=1 // pred_check_branch
      %1413 = sbr.rel (0) target = $region57
    $region56: #{_forward_impl.1} parent=1 // pred_region
      %s1415 = ssub.s32 128, 128
      %1416 = vsyncadd [#allocation4], %s1415
      %s1418 = sshll.u32 [#allocation11], 4
      %s1419 = int_to_ptr.vmem [resolvable:$true] %s1418
      %1421 = dma.vmem_to_hbm [thread:$0]  %s1419, 128, %s8, [#allocation4]
    $region57: #{_forward_impl.1} parent=1 // pred_fallthru
      _
    // Predicated region
    $region58: #{_forward_impl.1} parent=1 // pred_check
      _
    $region59: #{_forward_impl.1} parent=1 // pred_check_branch
      %1423 = sbr.rel (0) target = $region61
    $region60: #{_forward_impl.1} parent=1 // pred_region
      %1424 = dma.done [#allocation4], 128
    $region61: #{_forward_impl.1} parent=1 // pred_fallthru
      _
    %1425 = vsyncpa [#allocation3], 1
    %1426 = vsyncpa [#allocation6], 1
    %1427 = vsyncpa [#allocation9], 1
    %1428 = vsyncpa [#allocation4], 1

</llo_original>
